<compile_context>
chip_gen: v7x
topology: tpu7x:2x2x1
jax: 0.10.0
libtpu: 0.0.40
codegen_flags: <defaults>
</compile_context>

<pallas_src>
import math
from functools import partial

import jax
import jax.numpy as jnp
from jax import lax
from jax.experimental import pallas as pl
from jax.experimental.pallas import tpu as pltpu


# ----------------------------------------------------------------------------
# Fused Pallas kernel: interleaved complex rotation of q AND k (hot path)
# ----------------------------------------------------------------------------
def _make_rotate_kernel(nq_blocks):
    """Grid = (J lane-blocks, I row-blocks) with I = nq_blocks + nk_blocks.

    Inner steps i < nq_blocks rotate a q row-block, the rest rotate a k
    row-block.  Only the active output is written; the inactive output's
    block index is constant across its idle steps, so its (already valid)
    buffer is simply held resident and flushed unchanged.
    """

    def kernel(cos_ref, sin_ref, q_ref, k_ref, oq_ref, ok_ref):
        i = pl.program_id(1)

        def rotate(x_ref, o_ref):
            # Interleaved rotation:
            #   out[2j]   = x[2j]  *cos_j + x[2j+1]*(-sin_j)
            #   out[2j+1] = x[2j+1]*cos_j + x[2j]  *(+sin_j)
            # cos_ref holds cos duplicated per pair; sin_ref holds the signed
            # sin (-sin on even lanes, +sin on odd lanes).
            x = x_ref[...].astype(jnp.float32)
            tl = x.shape[-1]
            x_next = pltpu.roll(x, shift=tl - 1, axis=1)  # x_next[l] = x[l+1] (XLU)
            x_prev = pltpu.roll(x, shift=1, axis=1)       # x_prev[l] = x[l-1] (XLU)
            lane = lax.broadcasted_iota(jnp.int32, x.shape, 1)
            # Even lanes take x_next (in-block), odd lanes take x_prev
            # (in-block): the roll wrap-around lanes are never selected as
            # long as the lane tile is even.
            pair = jnp.where((lane & 1) == 0, x_next, x_prev)
            out = x * cos_ref[...] + pair * sin_ref[...]
            o_ref[...] = out.astype(o_ref.dtype)

        @pl.when(i < nq_blocks)
        def _q_phase():
            rotate(q_ref, oq_ref)

        @pl.when(i >= nq_blocks)
        def _k_phase():
            rotate(k_ref, ok_ref)

    return kernel


# ----------------------------------------------------------------------------
# Block-size / VMEM selection
# ----------------------------------------------------------------------------
def _vmem_capacity_bytes():
    try:
        info = pltpu.get_tpu_info()
        cap = getattr(info, "vmem_capacity_bytes", None)
        if cap:
            return int(cap)
    except Exception:
        pass
    return 64 * 1024 * 1024  # conservative default (v7x per-TensorCore)


def _pick_lane_block(ld, max_itemsize, target_block_bytes):
    """Lane tile: a 128-multiple divisor of ld (even => pair-safe)."""
    if ld % 128 != 0:
        # TODO(synk): non-128-multiple L*d_head degrades to masked partial
        # stores; a padded layout would be needed to avoid vst.msk here.
        return ld
    lane_budget = max(128, min(32768, target_block_bytes // (8 * max_itemsize)))
    cands = [t for t in range(128, ld + 1, 128) if ld % t == 0 and t <= lane_budget]
    tl = max(cands) if cands else 128
    # Prefer >= 2 lane blocks: gives the (outer) parallel axis something to
    # shard across v7x's two TensorCores and bounds resident-table size.
    if tl == ld and ld >= 256 and (ld // 2) % 128 == 0:
        tl = ld // 2
    return tl


def _pick_row_block(rows, row_bytes, target_block_bytes, want_blocks=2):
    """Largest sublane-aligned (x8) divisor of rows within the byte budget,
    preferring choices that yield >= want_blocks row blocks (pipelining)."""
    budget = max(1, target_block_bytes // max(row_bytes, 1))
    divs = [d for d in range(8, rows + 1, 8) if rows % d == 0 and d <= budget]
    pref = [d for d in divs if rows // d >= want_blocks]
    if pref:
        return max(pref)
    if divs:
        return max(divs)
    return rows  # block == full row axis is always legal


# ----------------------------------------------------------------------------
# Fused q/k rotation wrapper
# ----------------------------------------------------------------------------
def _fused_rotate(q, k, cos_i, sin_i):
    Bq, Hq, L, D = q.shape
    Bk, Hk, Lk, Dk = k.shape
    assert (Bq, L, D) == (Bk, Lk, Dk)
    ld = L * D
    rows_q, rows_k = Bq * Hq, Bk * Hk

    # NOTE: free only when q/k are contiguous in (B, H, L, D); under jit this
    # is a layout relabel, not a copy.
    qf = q.reshape(rows_q, ld)
    kf = k.reshape(rows_k, ld)

    itemsize = max(q.dtype.itemsize, k.dtype.itemsize)
    cap = _vmem_capacity_bytes()
    # ~2 MiB per-tensor blocks on v7x (64 MiB VMEM/TC), ~4 MiB on v5e/v6e.
    target = (4 << 20) if cap >= (100 << 20) else (2 << 20)

    tl = _pick_lane_block(ld, itemsize, target)
    tb_q = _pick_row_block(rows_q, tl * q.dtype.itemsize, target)
    tb_k = _pick_row_block(rows_k, tl * k.dtype.itemsize, target)
    nq, nk = rows_q // tb_q, rows_k // tb_k
    n_lane = ld // tl
    grid = (n_lane, nq + nk)

    # VMEM budget: double-buffered in/out blocks + tables + f32 temporaries,
    # with headroom; never claim more than 75% of physical VMEM.
    blk_q = tb_q * tl * q.dtype.itemsize
    blk_k = tb_k * tl * k.dtype.itemsize
    f32_tmp = 6 * max(tb_q, tb_k) * tl * 4
    vmem_needed = 2 * (2 * blk_q + 2 * blk_k + 2 * tl * 4) + f32_tmp
    vmem_limit = int(min(0.75 * cap, max(2 * vmem_needed, 32 << 20)))

    # Routed index maps: during the k phase the q block index is pinned to the
    # last q block (no re-DMA, no stale flush); symmetrically for k.
    tab_spec = pl.BlockSpec((1, tl), lambda j, i: (0, j))
    q_in_spec = pl.BlockSpec((tb_q, tl), lambda j, i: (jnp.minimum(i, nq - 1), j))
    k_in_spec = pl.BlockSpec((tb_k, tl), lambda j, i: (jnp.maximum(i - nq, 0), j))
    oq_spec = pl.BlockSpec((tb_q, tl), lambda j, i: (jnp.minimum(i, nq - 1), j))
    ok_spec = pl.BlockSpec((tb_k, tl), lambda j, i: (jnp.maximum(i - nq, 0), j))

    # NOTE: callers that donate q/k can add input_output_aliases={2: 0, 3: 1}
    # to rotate in place; left off by default because aliasing non-donated
    # inputs forces an extra XLA copy.
    oq, ok = pl.pallas_call(
        _make_rotate_kernel(nq),
        out_shape=(
            jax.ShapeDtypeStruct((rows_q, ld), q.dtype),
            jax.ShapeDtypeStruct((rows_k, ld), k.dtype),
        ),
        grid_spec=pltpu.PrefetchScalarGridSpec(
            num_scalar_prefetch=0,
            grid=grid,
            in_specs=[tab_spec, tab_spec, q_in_spec, k_in_spec],
            out_specs=[oq_spec, ok_spec],
        ),
        compiler_params=pltpu.CompilerParams(
            dimension_semantics=("parallel", "arbitrary"),
            vmem_limit_bytes=vmem_limit,
        ),
    )(cos_i, sin_i, qf, kf)
    return oq.reshape(q.shape), ok.reshape(k.shape)


# ----------------------------------------------------------------------------
# Fourier-term tables (tiny: O(L * d_head)) — plain JAX glue, negligible cost.
# ----------------------------------------------------------------------------
def _compute_fourier_terms(L, d_head, context_len, base, n_terms, fourier_weights):
    dominant = 1.0 / (base ** (jnp.arange(0, d_head, 2, dtype=jnp.float32) / d_head))
    fourier_freqs = jnp.linspace(0.0, math.pi, n_terms)          # (T,)
    floor_freq = 2.0 * math.pi / context_len

    pos = jnp.arange(L, dtype=jnp.float32)                       # (L,)
    dom = pos[:, None] * dominant[None, :]                       # (L, Dh)
    dom = jnp.where(dominant[None, :] > floor_freq, dom, 0.0)
    dom_cos, dom_sin = jnp.cos(dom), jnp.sin(dom)

    fg = pos[:, None] * fourier_freqs[None, :]                   # (L, T)
    w = fourier_weights.astype(jnp.float32)                      # (2, Dh, T)
    f_cos = dom_cos + jnp.cos(fg) @ w[0].T                       # (L, Dh)
    f_sin = dom_sin + jnp.sin(fg) @ w[1].T                       # (L, Dh)
    return f_cos, f_sin


def _interleaved_tables(f_cos, f_sin):
    """Fold the pair rotation into two interleaved tables.

    cos_i[l, 2j] = cos[l,j], cos_i[l, 2j+1] = cos[l,j]
    sin_i[l, 2j] = -sin[l,j], sin_i[l, 2j+1] = +sin[l,j]
    Flattened to (1, L*D) to match the kernel's lane-dense layout.
    """
    L, Dh = f_cos.shape
    ld = L * 2 * Dh
    cos_i = jnp.stack((f_cos, f_cos), axis=-1).reshape(1, ld)
    sin_i = jnp.stack((-f_sin, f_sin), axis=-1).reshape(1, ld)
    return cos_i, sin_i


# ----------------------------------------------------------------------------
# Module-equivalent forward
# ----------------------------------------------------------------------------
@partial(jax.jit, static_argnames=("d_head", "context_len", "base", "n_fourier_terms"))
def fourier_position_embedding_forward(
    q, k, fourier_weights, *, d_head, context_len, base=10000, n_fourier_terms=4
):
    B, n_heads, L, d_head_input = q.shape
    if d_head_input != d_head or d_head % 2 != 0:
        raise ValueError("d_head mismatch or odd d_head")
    f_cos, f_sin = _compute_fourier_terms(
        L, d_head, context_len, base, n_fourier_terms, fourier_weights
    )
    cos_i, sin_i = _interleaved_tables(f_cos, f_sin)
    return _fused_rotate(q, k, cos_i, sin_i)


# ----------------------------------------------------------------------------
# Pure-JAX reference (mirrors PyTorch apply_fourier_pos_emb) for validation
# ----------------------------------------------------------------------------
def _reference_apply(x, f_cos, f_sin):
    B, H, L, D = x.shape
    dtype = x.dtype
    xc = x.astype(jnp.float32).reshape(B, H, L, D // 2, 2)
    xr, xi = xc[..., 0], xc[..., 1]
    rr = xr * f_cos - xi * f_sin
    ri = xr * f_sin + xi * f_cos
    out = jnp.stack((rr, ri), axis=-1).reshape(B, H, L, D)
    return out.astype(dtype)


if __name__ == "__main__":
    # module config
    d_head = 32
    d_head_half = d_head // 2
    context_len = 64
    n_fourier_terms = 4
    fourier_sigma = 0.1

    # small input shapes (GQA-style: fewer KV heads)
    B, n_heads, n_kv_heads, L = 2, 4, 2, 8

    key = jax.random.PRNGKey(0)
    kw, kq, kk = jax.random.split(key, 3)

    fourier_weights = (
        jax.random.normal(kw, (2, d_head_half, n_fourier_terms), dtype=jnp.float32)
        * fourier_sigma
    )

    q = jax.random.normal(kq, (B, n_heads, L, d_head), dtype=jnp.float32)
    k = jax.random.normal(kk, (B, n_kv_heads, L, d_head), dtype=jnp.float32)

    q_rot, k_rot = fourier_position_embedding_forward(
        q, k, fourier_weights,
        d_head=d_head, context_len=context_len,
        base=10000, n_fourier_terms=n_fourier_terms,
    )
    jax.block_until_ready((q_rot, k_rot))

    # validate against pure-JAX reference
    f_cos, f_sin = _compute_fourier_terms(
        L, d_head, context_len, 10000, n_fourier_terms, fourier_weights
    )
    q_ref = _reference_apply(q, f_cos, f_sin)
    k_ref = _reference_apply(k, f_cos, f_sin)
    assert q_rot.shape == q.shape and q_rot.dtype == q.dtype
    assert k_rot.shape == k.shape and k_rot.dtype == k.dtype
    assert jnp.allclose(q_rot, q_ref, atol=1e-5, rtol=1e-5)
    assert jnp.allclose(k_rot, k_ref, atol=1e-5, rtol=1e-5)

    print("KERNEL_OK")
</pallas_src>

<mosaic_0001>
module attributes {stable_mosaic.version = 11 : i64} {
  func.func @kernel(%arg0: i32, %arg1: i32, %arg2: memref<1x128xf32, #tpu.memory_space<vmem>>, %arg3: memref<1x128xf32, #tpu.memory_space<vmem>>, %arg4: memref<8x128xf32, #tpu.memory_space<vmem>>, %arg5: memref<4x128xf32, #tpu.memory_space<vmem>>, %arg6: memref<8x128xf32, #tpu.memory_space<vmem>>, %arg7: memref<4x128xf32, #tpu.memory_space<vmem>>) attributes {dimension_semantics = [#tpu.dimension_semantics<parallel>, #tpu.dimension_semantics<arbitrary>], iteration_bounds = array<i64: 2, 2>, scalar_prefetch = 0 : i64, scratch_operands = 0 : i64, tpu.core_type = #tpu.core_type<tc>, window_params = [{transform_indices = @transform_0, window_bounds = array<i64: 1, 128>}, {transform_indices = @transform_1, window_bounds = array<i64: 1, 128>}, {transform_indices = @transform_2, window_bounds = array<i64: 8, 128>}, {transform_indices = @transform_3, window_bounds = array<i64: 4, 128>}, {transform_indices = @transform_4, window_bounds = array<i64: 8, 128>}, {transform_indices = @transform_5, window_bounds = array<i64: 4, 128>}]} {
    %c1_i32 = arith.constant 1 : i32
    %0 = arith.cmpi slt, %arg1, %c1_i32 : i32
    %1 = arith.extui %0 : i1 to i32
    %c0_i32 = arith.constant 0 : i32
    %2 = arith.cmpi ne, %1, %c0_i32 : i32
    scf.if %2 {
      %c0 = arith.constant 0 : index
      %c0_2 = arith.constant 0 : index
      %6 = vector.load %arg4[%c0, %c0_2] : memref<8x128xf32, #tpu.memory_space<vmem>>, vector<8x128xf32>
      %c127_i32 = arith.constant 127 : i32
      %7 = tpu.dynamic_rotate %6 by %c127_i32 dim 1 : vector<8x128xf32>, i32 -> vector<8x128xf32>
      %c1_i32_3 = arith.constant 1 : i32
      %8 = tpu.dynamic_rotate %6 by %c1_i32_3 dim 1 : vector<8x128xf32>, i32 -> vector<8x128xf32>
      %9 = tpu.iota {dimensions = array<i32: 1>} : vector<8x128xi32>
      %c1_i32_4 = arith.constant 1 : i32
      %10 = vector.broadcast %c1_i32_4 : i32 to vector<8x128xi32>
      %11 = arith.andi %9, %10 : vector<8x128xi32>
      %c0_i32_5 = arith.constant 0 : i32
      %12 = vector.broadcast %c0_i32_5 : i32 to vector<8x128xi32>
      %13 = arith.cmpi eq, %11, %12 : vector<8x128xi32>
      %14 = arith.select %13, %7, %8 : vector<8x128xi1>, vector<8x128xf32>
      %c0_6 = arith.constant 0 : index
      %c0_7 = arith.constant 0 : index
      %15 = vector.load %arg2[%c0_6, %c0_7] : memref<1x128xf32, #tpu.memory_space<vmem>>, vector<1x128xf32>
      %16 = vector.broadcast %15 : vector<1x128xf32> to vector<8x128xf32>
      %17 = arith.mulf %6, %16 : vector<8x128xf32>
      %c0_8 = arith.constant 0 : index
      %c0_9 = arith.constant 0 : index
      %18 = vector.load %arg3[%c0_8, %c0_9] : memref<1x128xf32, #tpu.memory_space<vmem>>, vector<1x128xf32>
      %19 = vector.broadcast %18 : vector<1x128xf32> to vector<8x128xf32>
      %20 = arith.mulf %14, %19 : vector<8x128xf32>
      %21 = arith.addf %17, %20 : vector<8x128xf32>
      %c0_10 = arith.constant 0 : index
      %c0_11 = arith.constant 0 : index
      %22 = vector.load %arg6[%c0_10, %c0_11] : memref<8x128xf32, #tpu.memory_space<vmem>>, vector<8x128xf32>
      tpu.vector_store %arg6[%c0_10, %c0_11], %21 {strides = array<i32>} : memref<8x128xf32, #tpu.memory_space<vmem>>, vector<8x128xf32>,
    } else {
    }
    %c1_i32_0 = arith.constant 1 : i32
    %3 = arith.cmpi sge, %arg1, %c1_i32_0 : i32
    %4 = arith.extui %3 : i1 to i32
    %c0_i32_1 = arith.constant 0 : i32
    %5 = arith.cmpi ne, %4, %c0_i32_1 : i32
    scf.if %5 {
      %c0 = arith.constant 0 : index
      %c0_2 = arith.constant 0 : index
      %6 = vector.load %arg5[%c0, %c0_2] : memref<4x128xf32, #tpu.memory_space<vmem>>, vector<4x128xf32>
      %c127_i32 = arith.constant 127 : i32
      %7 = tpu.dynamic_rotate %6 by %c127_i32 dim 1 : vector<4x128xf32>, i32 -> vector<4x128xf32>
      %c1_i32_3 = arith.constant 1 : i32
      %8 = tpu.dynamic_rotate %6 by %c1_i32_3 dim 1 : vector<4x128xf32>, i32 -> vector<4x128xf32>
      %9 = tpu.iota {dimensions = array<i32: 1>} : vector<4x128xi32>
      %c1_i32_4 = arith.constant 1 : i32
      %10 = vector.broadcast %c1_i32_4 : i32 to vector<4x128xi32>
      %11 = arith.andi %9, %10 : vector<4x128xi32>
      %c0_i32_5 = arith.constant 0 : i32
      %12 = vector.broadcast %c0_i32_5 : i32 to vector<4x128xi32>
      %13 = arith.cmpi eq, %11, %12 : vector<4x128xi32>
      %14 = arith.select %13, %7, %8 : vector<4x128xi1>, vector<4x128xf32>
      %c0_6 = arith.constant 0 : index
      %c0_7 = arith.constant 0 : index
      %15 = vector.load %arg2[%c0_6, %c0_7] : memref<1x128xf32, #tpu.memory_space<vmem>>, vector<1x128xf32>
      %16 = vector.broadcast %15 : vector<1x128xf32> to vector<4x128xf32>
      %17 = arith.mulf %6, %16 : vector<4x128xf32>
      %c0_8 = arith.constant 0 : index
      %c0_9 = arith.constant 0 : index
      %18 = vector.load %arg3[%c0_8, %c0_9] : memref<1x128xf32, #tpu.memory_space<vmem>>, vector<1x128xf32>
      %19 = vector.broadcast %18 : vector<1x128xf32> to vector<4x128xf32>
      %20 = arith.mulf %14, %19 : vector<4x128xf32>
      %21 = arith.addf %17, %20 : vector<4x128xf32>
      %c0_10 = arith.constant 0 : index
      %c0_11 = arith.constant 0 : index
      %22 = vector.load %arg7[%c0_10, %c0_11] : memref<4x128xf32, #tpu.memory_space<vmem>>, vector<4x128xf32>
      tpu.vector_store %arg7[%c0_10, %c0_11], %21 {strides = array<i32>} : memref<4x128xf32, #tpu.memory_space<vmem>>, vector<4x128xf32>,
    } else {
    }
    return
  }
  func.func @transform_0(%arg0: i32, %arg1: i32) -> (i32, i32) {
    %c0_i32 = arith.constant 0 : i32
    %c0_i32_0 = arith.constant 0 : i32
    return %c0_i32, %arg0 : i32, i32
  }
  func.func @transform_1(%arg0: i32, %arg1: i32) -> (i32, i32) {
    %c0_i32 = arith.constant 0 : i32
    %c0_i32_0 = arith.constant 0 : i32
    return %c0_i32, %arg0 : i32, i32
  }
  func.func @transform_2(%arg0: i32, %arg1: i32) -> (i32, i32) {
    %c0_i32 = arith.constant 0 : i32
    %0 = arith.minsi %arg1, %c0_i32 : i32
    %c0_i32_0 = arith.constant 0 : i32
    return %0, %arg0 : i32, i32
  }
  func.func @transform_3(%arg0: i32, %arg1: i32) -> (i32, i32) {
    %c1_i32 = arith.constant 1 : i32
    %0 = arith.subi %arg1, %c1_i32 : i32
    %c0_i32 = arith.constant 0 : i32
    %1 = arith.maxsi %0, %c0_i32 : i32
    %c0_i32_0 = arith.constant 0 : i32
    return %1, %arg0 : i32, i32
  }
  func.func @transform_4(%arg0: i32, %arg1: i32) -> (i32, i32) {
    %c0_i32 = arith.constant 0 : i32
    %0 = arith.minsi %arg1, %c0_i32 : i32
    %c0_i32_0 = arith.constant 0 : i32
    return %0, %arg0 : i32, i32
  }
  func.func @transform_5(%arg0: i32, %arg1: i32) -> (i32, i32) {
    %c1_i32 = arith.constant 1 : i32
    %0 = arith.subi %arg1, %c1_i32 : i32
    %c0_i32 = arith.constant 0 : i32
    %1 = arith.maxsi %0, %c0_i32 : i32
    %c0_i32_0 = arith.constant 0 : i32
    return %1, %arg0 : i32, i32
  }
}

</mosaic_0001>

<llo_original>
// kernel: fourier_position_embedding_forward.1
$region0: #{fourier_position_embedding_forward.1}
  #allocation0 [shape = 'u32[]', space=smem, size = 0x4, offset = 0x4, fixed_abs, tag = 'smem constant byte address 0x4 - core index']
  #allocation1 [shape = 'u32[144,128]{1,0:T(1,128)}', space=vmem, size = 0x12000, scoped, tag = 'internal scratch']
  %s0 = inlined_call_operand.vmem [shape: f32[1,256], index: 0, kind: input, shape index: {}]
  %s1 = inlined_call_operand.vmem [shape: f32[1,256], index: 1, kind: input, shape index: {}]
  %s2 = inlined_call_operand.vmem [shape: f32[8,256], index: 2, kind: input, shape index: {}]
  %s3 = inlined_call_operand.vmem [shape: f32[4,256], index: 3, kind: input, shape index: {}]
  %s4 = inlined_call_operand.vmem [shape: f32[8,256], index: 4, kind: output, shape index: {0}]
  %s5 = inlined_call_operand.vmem [shape: f32[4,256], index: 5, kind: output, shape index: {1}]
  %6 = xla_tuple %s4, %s5
  %s7 = sld [smem:[#allocation0]]
  $region65: #{fourier_position_embedding_forward.1} parent=0
    _
  %s9 = ssub.s32 1, %s7
  %s10 = scalar_select 0, %s9, %s7
  loop: start=0, step=1, limit=6
  $region2: #{fourier_position_embedding_forward.1} parent=0 // loop_pre_header
    _
  $region3: #{fourier_position_embedding_forward.1} parent=0 // loop_header
    %s12 = sphi 0, %s16
    %p13 = scmp.ge.s32.totalorder %s12, 6
    %s19 = sphi 0, %s31
    %s20 = sphi 0, %s27
    %s21 = sphi 0, %s19
    %s22 = sphi 0, %s20
    %s23 = sphi 0, %s21
    %s24 = sphi 0, %s22
    %s34 = sphi 0, %s36
    %s37 = sphi 0, %s34
    %s38 = sphi 0, %s37
    %s54 = sphi 0, %s38
    %s60 = sphi 0, %s62
    %s63 = sphi 0, %s60
    %s64 = sphi 0, %s63
    %s80 = sphi 0, %s64
    %s92 = sphi 0, %s94
    %s95 = sphi 0, %s92
    %s96 = sphi 0, %s95
    %s112 = sphi 0, %s96
    %s126 = sphi 0, %s128
    %s129 = sphi 0, %s126
    %s130 = sphi 0, %s129
    %s146 = sphi 0, %s130
    %s158 = sphi 0, %s160
    %s161 = sphi 0, %s158
    %s162 = sphi 0, %s161
    %s178 = sphi 0, %s162
    %s192 = sphi 0, %s194
    %s195 = sphi 0, %s192
    %s196 = sphi 0, %s195
    %s212 = sphi 0, %s196
  $region4: #{fourier_position_embedding_forward.1} parent=0 // loop_header_branch
    %15 = sbr.rel (%p13) target = $region8
  $region5: #{fourier_position_embedding_forward.1} parent=0 // loop_body
    %s17 = ssub.s32 %s12, 1
    %s18 = ssub.s32 %s12, 2
    %s25 = sadd.s32 1, %s20
    %p26 = scmp.ge.s32.totalorder %s25, 2
    %s27 = scalar_select %p26, 0, %s25
    %s28 = sadd.s32 1, %s19
    %s29 = scalar_select %p26, %s28, %s19
    %p30 = scmp.ge.s32.totalorder %s29, 2
    %s31 = scalar_select %p30, 0, %s29
    %s32 = ssub.s32 %s19, %s31
    %p33 = scmp.eq.s32.totalorder %s32, 0
    %s35 = sadd.s32 %s34, 1
    %s36 = scalar_select %p33, %s34, %s35
    %p39 = pneg %p33
    %p40 = scmp.eq.s32.totalorder %s12, 3
    %p41 = por %p39, %p40
    %p42 = scmp.ne.s32.totalorder %s34, %s37
    %p43 = scmp.eq.s32.totalorder %s12, 0
    %p44 = por %p42, %p43
    %p45 = scmp.ne.s32.totalorder %s34, %s37
    %p46 = scmp.eq.s32.totalorder %s17, 3
    %p47 = por %p45, %p46
    %p48 = scmp.ne.s32.totalorder %s37, %s38
    %p49 = scmp.eq.s32.totalorder %s17, 0
    %p50 = por %p48, %p49
    %p51 = scmp.ne.s32.totalorder %s37, %s38
    %p52 = scmp.eq.s32.totalorder %s18, 3
    %p53 = por %p51, %p52
    %p55 = scmp.ne.s32.totalorder %s38, %s54
    %p56 = scmp.eq.s32.totalorder %s18, 0
    %p57 = por %p55, %p56
    %s58 = ssub.s32 %s19, %s31
    %p59 = scmp.eq.s32.totalorder %s58, 0
    %s61 = sadd.s32 %s60, 1
    %s62 = scalar_select %p59, %s60, %s61
    %p65 = pneg %p59
    %p66 = scmp.eq.s32.totalorder %s12, 3
    %p67 = por %p65, %p66
    %p68 = scmp.ne.s32.totalorder %s60, %s63
    %p69 = scmp.eq.s32.totalorder %s12, 0
    %p70 = por %p68, %p69
    %p71 = scmp.ne.s32.totalorder %s60, %s63
    %p72 = scmp.eq.s32.totalorder %s17, 3
    %p73 = por %p71, %p72
    %p74 = scmp.ne.s32.totalorder %s63, %s64
    %p75 = scmp.eq.s32.totalorder %s17, 0
    %p76 = por %p74, %p75
    %p77 = scmp.ne.s32.totalorder %s63, %s64
    %p78 = scmp.eq.s32.totalorder %s18, 3
    %p79 = por %p77, %p78
    %p81 = scmp.ne.s32.totalorder %s64, %s80
    %p82 = scmp.eq.s32.totalorder %s18, 0
    %p83 = por %p81, %p82
    %p84 = scmp.lt.s32.totalorder %s20, 0
    %s85 = scalar_select %p84, %s20, 0
    %p86 = scmp.lt.s32.totalorder %s27, 0
    %s87 = scalar_select %p86, %s27, 0
    %s88 = ssub.s32 %s85, %s87
    %s89 = ssub.s32 %s19, %s31
    %s90 = sor.u32 %s88, %s89
    %p91 = scmp.eq.s32.totalorder %s90, 0
    %s93 = sadd.s32 %s92, 1
    %s94 = scalar_select %p91, %s92, %s93
    %p97 = pneg %p91
    %p98 = scmp.eq.s32.totalorder %s12, 3
    %p99 = por %p97, %p98
    %p100 = scmp.ne.s32.totalorder %s92, %s95
    %p101 = scmp.eq.s32.totalorder %s12, 0
    %p102 = por %p100, %p101
    %p103 = scmp.ne.s32.totalorder %s92, %s95
    %p104 = scmp.eq.s32.totalorder %s17, 3
    %p105 = por %p103, %p104
    %p106 = scmp.ne.s32.totalorder %s95, %s96
    %p107 = scmp.eq.s32.totalorder %s17, 0
    %p108 = por %p106, %p107
    %p109 = scmp.ne.s32.totalorder %s95, %s96
    %p110 = scmp.eq.s32.totalorder %s18, 3
    %p111 = por %p109, %p110
    %p113 = scmp.ne.s32.totalorder %s96, %s112
    %p114 = scmp.eq.s32.totalorder %s18, 0
    %p115 = por %p113, %p114
    %s116 = ssub.s32 %s20, 1
    %p117 = scmp.gt.s32.totalorder %s116, 0
    %s118 = scalar_select %p117, %s116, 0
    %s119 = ssub.s32 %s27, 1
    %p120 = scmp.gt.s32.totalorder %s119, 0
    %s121 = scalar_select %p120, %s119, 0
    %s122 = ssub.s32 %s118, %s121
    %s123 = ssub.s32 %s19, %s31
    %s124 = sor.u32 %s122, %s123
    %p125 = scmp.eq.s32.totalorder %s124, 0
    %s127 = sadd.s32 %s126, 1
    %s128 = scalar_select %p125, %s126, %s127
    %p131 = pneg %p125
    %p132 = scmp.eq.s32.totalorder %s12, 3
    %p133 = por %p131, %p132
    %p134 = scmp.ne.s32.totalorder %s126, %s129
    %p135 = scmp.eq.s32.totalorder %s12, 0
    %p136 = por %p134, %p135
    %p137 = scmp.ne.s32.totalorder %s126, %s129
    %p138 = scmp.eq.s32.totalorder %s17, 3
    %p139 = por %p137, %p138
    %p140 = scmp.ne.s32.totalorder %s129, %s130
    %p141 = scmp.eq.s32.totalorder %s17, 0
    %p142 = por %p140, %p141
    %p143 = scmp.ne.s32.totalorder %s129, %s130
    %p144 = scmp.eq.s32.totalorder %s18, 3
    %p145 = por %p143, %p144
    %p147 = scmp.ne.s32.totalorder %s130, %s146
    %p148 = scmp.eq.s32.totalorder %s18, 0
    %p149 = por %p147, %p148
    %p150 = scmp.lt.s32.totalorder %s20, 0
    %s151 = scalar_select %p150, %s20, 0
    %p152 = scmp.lt.s32.totalorder %s27, 0
    %s153 = scalar_select %p152, %s27, 0
    %s154 = ssub.s32 %s151, %s153
    %s155 = ssub.s32 %s19, %s31
    %s156 = sor.u32 %s154, %s155
    %p157 = scmp.eq.s32.totalorder %s156, 0
    %s159 = sadd.s32 %s158, 1
    %s160 = scalar_select %p157, %s158, %s159
    %p163 = pneg %p157
    %p164 = scmp.eq.s32.totalorder %s12, 3
    %p165 = por %p163, %p164
    %p166 = scmp.ne.s32.totalorder %s158, %s161
    %p167 = scmp.eq.s32.totalorder %s12, 0
    %p168 = por %p166, %p167
    %p169 = scmp.ne.s32.totalorder %s158, %s161
    %p170 = scmp.eq.s32.totalorder %s17, 3
    %p171 = por %p169, %p170
    %p172 = scmp.ne.s32.totalorder %s161, %s162
    %p173 = scmp.eq.s32.totalorder %s17, 0
    %p174 = por %p172, %p173
    %p175 = scmp.ne.s32.totalorder %s161, %s162
    %p176 = scmp.eq.s32.totalorder %s18, 3
    %p177 = por %p175, %p176
    %p179 = scmp.ne.s32.totalorder %s162, %s178
    %p180 = scmp.eq.s32.totalorder %s18, 0
    %p181 = por %p179, %p180
    %s182 = ssub.s32 %s20, 1
    %p183 = scmp.gt.s32.totalorder %s182, 0
    %s184 = scalar_select %p183, %s182, 0
    %s185 = ssub.s32 %s27, 1
    %p186 = scmp.gt.s32.totalorder %s185, 0
    %s187 = scalar_select %p186, %s185, 0
    %s188 = ssub.s32 %s184, %s187
    %s189 = ssub.s32 %s19, %s31
    %s190 = sor.u32 %s188, %s189
    %p191 = scmp.eq.s32.totalorder %s190, 0
    %s193 = sadd.s32 %s192, 1
    %s194 = scalar_select %p191, %s192, %s193
    %p197 = pneg %p191
    %p198 = scmp.eq.s32.totalorder %s12, 3
    %p199 = por %p197, %p198
    %p200 = scmp.ne.s32.totalorder %s192, %s195
    %p201 = scmp.eq.s32.totalorder %s12, 0
    %p202 = por %p200, %p201
    %p203 = scmp.ne.s32.totalorder %s192, %s195
    %p204 = scmp.eq.s32.totalorder %s17, 3
    %p205 = por %p203, %p204
    %p206 = scmp.ne.s32.totalorder %s195, %s196
    %p207 = scmp.eq.s32.totalorder %s17, 0
    %p208 = por %p206, %p207
    %p209 = scmp.ne.s32.totalorder %s195, %s196
    %p210 = scmp.eq.s32.totalorder %s18, 3
    %p211 = por %p209, %p210
    %p213 = scmp.ne.s32.totalorder %s196, %s212
    %p214 = scmp.eq.s32.totalorder %s18, 0
    %p215 = por %p213, %p214
    %p216 = scmp.le.s32.totalorder 1, %s12
    %p217 = scmp.lt.s32.totalorder %s12, 5
    %p218 = pnand %p216, %p217
    %p219 = pneg %p218
    // Predicated region
    $region9: #{fourier_position_embedding_forward.1} parent=5 // pred_check
      _
    $region10: #{fourier_position_embedding_forward.1} parent=5 // pred_check_branch
      %221 = sbr.rel (%p218) target = $region12
    $region11: #{fourier_position_embedding_forward.1} parent=5 // pred_region
      %s222 = ssub.s32 %s12, 1
    $region12: #{fourier_position_embedding_forward.1} parent=5 // pred_fallthru
      _
    %p223 = scmp.lt.s32.totalorder %s12, 4
    // Predicated region
    $region13: #{fourier_position_embedding_forward.1} parent=5 // pred_check
      %p224 = pneg %p223
    $region14: #{fourier_position_embedding_forward.1} parent=5 // pred_check_branch
      %226 = sbr.rel (%p224) target = $region16
    $region15: #{fourier_position_embedding_forward.1} parent=5 // pred_region
      // Predicated region
      $region17: #{fourier_position_embedding_forward.1} parent=15 // pred_check
        %p227 = pneg %p44
      $region18: #{fourier_position_embedding_forward.1} parent=15 // pred_check_branch
        %229 = sbr.rel (%p227) target = $region20
      $region19: #{fourier_position_embedding_forward.1} parent=15 // pred_region
        %p230 = scmp.lt.s32.totalorder %s19, 1
        %s231 = scalar_select %p230, %s19, 1
        %s232 = scalar_lea.vmem %s0, %s231
      $region20: #{fourier_position_embedding_forward.1} parent=15 // pred_fallthru
        _
      // Predicated region
      $region21: #{fourier_position_embedding_forward.1} parent=15 // pred_check
        %p233 = pneg %p70
      $region22: #{fourier_position_embedding_forward.1} parent=15 // pred_check_branch
        %235 = sbr.rel (%p233) target = $region24
      $region23: #{fourier_position_embedding_forward.1} parent=15 // pred_region
        %p236 = scmp.lt.s32.totalorder %s19, 1
        %s237 = scalar_select %p236, %s19, 1
        %s238 = scalar_lea.vmem %s1, %s237
      $region24: #{fourier_position_embedding_forward.1} parent=15 // pred_fallthru
        _
      // Predicated region
      $region25: #{fourier_position_embedding_forward.1} parent=15 // pred_check
        %p239 = pneg %p102
      $region26: #{fourier_position_embedding_forward.1} parent=15 // pred_check_branch
        %241 = sbr.rel (%p239) target = $region28
      $region27: #{fourier_position_embedding_forward.1} parent=15 // pred_region
        %p242 = scmp.lt.s32.totalorder %s20, 0
        %s243 = scalar_select %p242, %s20, 0
        %p244 = scmp.lt.s32.totalorder %s243, 0
        %s245 = scalar_select %p244, %s243, 0
        %p246 = scmp.lt.s32.totalorder %s19, 1
        %s247 = scalar_select %p246, %s19, 1
        %s248 = smul.addr %s245, 2
        %s249 = sadd.s32 %s247, %s248
        %s250 = smul.addr %s249, 8
        %s251 = scalar_lea.vmem %s2, %s250
        %p252 = scmp.lt.s32.totalorder %s20, 0
        %s253 = scalar_select %p252, %s20, 0
      $region28: #{fourier_position_embedding_forward.1} parent=15 // pred_fallthru
        _
      // Predicated region
      $region29: #{fourier_position_embedding_forward.1} parent=15 // pred_check
        %p254 = pneg %p136
      $region30: #{fourier_position_embedding_forward.1} parent=15 // pred_check_branch
        %256 = sbr.rel (%p254) target = $region32
      $region31: #{fourier_position_embedding_forward.1} parent=15 // pred_region
        %s257 = ssub.s32 %s20, 1
        %p258 = scmp.gt.s32.totalorder %s257, 0
        %s259 = scalar_select %p258, %s257, 0
        %p260 = scmp.lt.s32.totalorder %s259, 0
        %s261 = scalar_select %p260, %s259, 0
        %p262 = scmp.lt.s32.totalorder %s19, 1
        %s263 = scalar_select %p262, %s19, 1
        %s264 = smul.addr %s261, 2
        %s265 = sadd.s32 %s263, %s264
        %s266 = smul.addr %s265, 4
        %s267 = scalar_lea.vmem %s3, %s266
        %s268 = ssub.s32 %s20, 1
        %p269 = scmp.gt.s32.totalorder %s268, 0
        %s270 = scalar_select %p269, %s268, 0
      $region32: #{fourier_position_embedding_forward.1} parent=15 // pred_fallthru
        _
    $region16: #{fourier_position_embedding_forward.1} parent=5 // pred_fallthru
      _
    %p271 = scmp.le.s32.totalorder 1, %s12
    %p272 = scmp.lt.s32.totalorder %s12, 5
    %p273 = pnand %p271, %p272
    %p274 = pneg %p273
    // Predicated region
    $region33: #{fourier_position_embedding_forward.1} parent=5 // pred_check
      _
    $region34: #{fourier_position_embedding_forward.1} parent=5 // pred_check_branch
      %276 = sbr.rel (%p273) target = $region36
    $region35: #{fourier_position_embedding_forward.1} parent=5 // pred_region
      %s277 = ssub.s32 %s12, 1
      %p278 = scmp.lt.s32.totalorder %s21, 1
      %s279 = scalar_select %p278, %s21, 1
      %s280 = scalar_lea.vmem %s0, %s279
      %p281 = pneg %p50
      %p282 = pneg %p47
      %p283 = scmp.lt.s32.totalorder %s21, 1
      %s284 = scalar_select %p283, %s21, 1
      %s285 = scalar_lea.vmem %s1, %s284
      %p286 = pneg %p76
      %p287 = pneg %p73
      %p288 = scmp.lt.s32.totalorder %s22, 0
      %s289 = scalar_select %p288, %s22, 0
      %p290 = scmp.lt.s32.totalorder %s289, 0
      %s291 = scalar_select %p290, %s289, 0
      %p292 = scmp.lt.s32.totalorder %s21, 1
      %s293 = scalar_select %p292, %s21, 1
      %s294 = smul.addr %s291, 2
      %s295 = sadd.s32 %s293, %s294
      %s296 = smul.addr %s295, 8
      %s297 = scalar_lea.vmem %s2, %s296
      %p298 = pneg %p108
      %p299 = pneg %p105
      %s300 = ssub.s32 %s22, 1
      %p301 = scmp.gt.s32.totalorder %s300, 0
      %s302 = scalar_select %p301, %s300, 0
      %p303 = scmp.lt.s32.totalorder %s302, 0
      %s304 = scalar_select %p303, %s302, 0
      %p305 = scmp.lt.s32.totalorder %s21, 1
      %s306 = scalar_select %p305, %s21, 1
      %s307 = smul.addr %s304, 2
      %s308 = sadd.s32 %s306, %s307
      %s309 = smul.addr %s308, 4
      %s310 = scalar_lea.vmem %s3, %s309
      %p311 = pneg %p142
      %p312 = pneg %p139
      %p313 = pneg %p174
      %p314 = pneg %p171
      %p315 = scmp.lt.s32.totalorder %s22, 0
      %s316 = scalar_select %p315, %s22, 0
      %p317 = scmp.lt.s32.totalorder %s316, 0
      %s318 = scalar_select %p317, %s316, 0
      %p319 = scmp.lt.s32.totalorder %s21, 1
      %s320 = scalar_select %p319, %s21, 1
      %s321 = smul.addr %s318, 2
      %s322 = sadd.s32 %s320, %s321
      %s323 = smul.addr %s322, 8
      %s324 = scalar_lea.vmem %s4, %s323
      %p325 = pneg %p208
      %p326 = pneg %p205
      %s327 = ssub.s32 %s22, 1
      %p328 = scmp.gt.s32.totalorder %s327, 0
      %s329 = scalar_select %p328, %s327, 0
      %p330 = scmp.lt.s32.totalorder %s329, 0
      %s331 = scalar_select %p330, %s329, 0
      %p332 = scmp.lt.s32.totalorder %s21, 1
      %s333 = scalar_select %p332, %s21, 1
      %s334 = smul.addr %s331, 2
      %s335 = sadd.s32 %s333, %s334
      %s336 = smul.addr %s335, 4
      %s337 = scalar_lea.vmem %s5, %s336
      %p338 = scmp.lt.s32.totalorder %s21, 1
      %s339 = scalar_select %p338, %s21, 1
      %s340 = scalar_lea.vmem %s0, %s339
      %p341 = scmp.lt.s32.totalorder %s21, 1
      %s342 = scalar_select %p341, %s21, 1
      %s343 = scalar_lea.vmem %s1, %s342
      %p344 = scmp.lt.s32.totalorder %s22, 0
      %s345 = scalar_select %p344, %s22, 0
      %p346 = scmp.lt.s32.totalorder %s345, 0
      %s347 = scalar_select %p346, %s345, 0
      %p348 = scmp.lt.s32.totalorder %s21, 1
      %s349 = scalar_select %p348, %s21, 1
      %s350 = smul.addr %s347, 2
      %s351 = sadd.s32 %s349, %s350
      %s352 = smul.addr %s351, 8
      %s353 = scalar_lea.vmem %s2, %s352
      %p354 = scmp.lt.s32.totalorder %s22, 0
      %s355 = scalar_select %p354, %s22, 0
      %s356 = ssub.s32 %s22, 1
      %p357 = scmp.gt.s32.totalorder %s356, 0
      %s358 = scalar_select %p357, %s356, 0
      %p359 = scmp.lt.s32.totalorder %s358, 0
      %s360 = scalar_select %p359, %s358, 0
      %p361 = scmp.lt.s32.totalorder %s21, 1
      %s362 = scalar_select %p361, %s21, 1
      %s363 = smul.addr %s360, 2
      %s364 = sadd.s32 %s362, %s363
      %s365 = smul.addr %s364, 4
      %s366 = scalar_lea.vmem %s3, %s365
      %s367 = ssub.s32 %s22, 1
      %p368 = scmp.gt.s32.totalorder %s367, 0
      %s369 = scalar_select %p368, %s367, 0
      %p370 = scmp.lt.s32.totalorder %s22, 0
      %s371 = scalar_select %p370, %s22, 0
      %p372 = scmp.lt.s32.totalorder %s371, 0
      %s373 = scalar_select %p372, %s371, 0
      %p374 = scmp.lt.s32.totalorder %s21, 1
      %s375 = scalar_select %p374, %s21, 1
      %s376 = smul.addr %s373, 2
      %s377 = sadd.s32 %s375, %s376
      %s378 = smul.addr %s377, 8
      %s379 = scalar_lea.vmem %s4, %s378
      %p380 = scmp.lt.s32.totalorder %s22, 0
      %s381 = scalar_select %p380, %s22, 0
      %s382 = ssub.s32 %s22, 1
      %p383 = scmp.gt.s32.totalorder %s382, 0
      %s384 = scalar_select %p383, %s382, 0
      %p385 = scmp.lt.s32.totalorder %s384, 0
      %s386 = scalar_select %p385, %s384, 0
      %p387 = scmp.lt.s32.totalorder %s21, 1
      %s388 = scalar_select %p387, %s21, 1
      %s389 = smul.addr %s386, 2
      %s390 = sadd.s32 %s388, %s389
      %s391 = smul.addr %s390, 4
      %s392 = scalar_lea.vmem %s5, %s391
      %s393 = ssub.s32 %s22, 1
      %p394 = scmp.gt.s32.totalorder %s393, 0
      %s395 = scalar_select %p394, %s393, 0
      %p396 = scmp.lt.s32.totalorder %s22, 1
      // Predicated region
      $region37: #{fourier_position_embedding_forward.1} parent=35 // pred_check
        %p397 = pneg %p396
      $region38: #{fourier_position_embedding_forward.1} parent=35 // pred_check_branch
        %399 = sbr.rel (%p397) target = $region40
      $region39: #{fourier_position_embedding_forward.1} parent=35 // pred_region
        %v400 = vld [vmem:[%s353] sm:$0xff]
        %401 = vrot.lane.b32.xlu0 %v400, 127
        %v402 = vpop.permute.xlu0 %401
        %403 = vrot.lane.b32.xlu0 %v400, 1
        %v404 = vpop.permute.xlu0 %403
        %v405 = vlaneseq
        %v406 = vand.u32 %v405, 127
        %v407 = vand.u32 %v406, 1
        %vm408 = vcmp.eq.s32.totalorder %v407, 0
        %v409 = vsel %vm408, %v402, %v404
        %v410 = vld [vmem:[%s340] sm:$0x1]
        %v412 = vlaneseq
        %v413 = vshrl.u32 %v412, 7
        %v414 = vsub.s32 0, %v413
        %v415 = vrot.slane %v410, %v414
        %v417 = vmul.f32 %v400, %v415
        %v418 = vld [vmem:[%s343] sm:$0x1]
        %v420 = vlaneseq
        %v421 = vshrl.u32 %v420, 7
        %v422 = vsub.s32 0, %v421
        %v423 = vrot.slane %v418, %v422
        %v425 = vmul.f32 %v409, %v423
        %v426 = vadd.f32 %v417, %v425
        %427 = vst [vmem:[%s379] sm:$0xff] %v426
      $region40: #{fourier_position_embedding_forward.1} parent=35 // pred_fallthru
        _
      %p428 = scmp.ge.s32.totalorder %s22, 1
      // Predicated region
      $region41: #{fourier_position_embedding_forward.1} parent=35 // pred_check
        %p429 = pneg %p428
      $region42: #{fourier_position_embedding_forward.1} parent=35 // pred_check_branch
        %431 = sbr.rel (%p429) target = $region44
      $region43: #{fourier_position_embedding_forward.1} parent=35 // pred_region
        %v432 = vld [vmem:[%s366] sm:$0xf]
        %433 = vrot.lane.b32.xlu0 %v432, 127
        %v434 = vpop.permute.xlu0 %433
        %435 = vrot.lane.b32.xlu0 %v432, 1
        %v436 = vpop.permute.xlu0 %435
        %v437 = vlaneseq
        %v438 = vand.u32 %v437, 127
        %v439 = vand.u32 %v438, 1
        %vm440 = vcmp.eq.s32.totalorder %v439, 0
        %v441 = vsel %vm440, %v434, %v436
        %v442 = vld [vmem:[%s340] sm:$0x1]
        %v444 = vlaneseq
        %v445 = vshrl.u32 %v444, 7
        %v446 = vsub.s32 0, %v445
        %v447 = vrot.slane %v442, %v446
        %v449 = vmul.f32 %v432, %v447
        %v450 = vld [vmem:[%s343] sm:$0x1]
        %v452 = vlaneseq
        %v453 = vshrl.u32 %v452, 7
        %v454 = vsub.s32 0, %v453
        %v455 = vrot.slane %v450, %v454
        %v457 = vmul.f32 %v441, %v455
        %v458 = vadd.f32 %v449, %v457
        %459 = vst [vmem:[%s392] sm:$0xf] %v458
      $region44: #{fourier_position_embedding_forward.1} parent=35 // pred_fallthru
        _
      %p460 = scmp.lt.s32.totalorder %s22, 0
      %s461 = scalar_select %p460, %s22, 0
      %p462 = scmp.lt.s32.totalorder %s461, 0
      %s463 = scalar_select %p462, %s461, 0
      %p464 = scmp.lt.s32.totalorder %s21, 1
      %s465 = scalar_select %p464, %s21, 1
      %s466 = smul.addr %s463, 2
      %s467 = sadd.s32 %s465, %s466
      %s468 = smul.addr %s467, 8
      %s469 = scalar_lea.vmem %s4, %s468
      %s470 = ssub.s32 %s22, 1
      %p471 = scmp.gt.s32.totalorder %s470, 0
      %s472 = scalar_select %p471, %s470, 0
      %p473 = scmp.lt.s32.totalorder %s472, 0
      %s474 = scalar_select %p473, %s472, 0
      %p475 = scmp.lt.s32.totalorder %s21, 1
      %s476 = scalar_select %p475, %s21, 1
      %s477 = smul.addr %s474, 2
      %s478 = sadd.s32 %s476, %s477
      %s479 = smul.addr %s478, 4
      %s480 = scalar_lea.vmem %s5, %s479
      // Predicated region
      $region45: #{fourier_position_embedding_forward.1} parent=35 // pred_check
        %p481 = pneg %p171
      $region46: #{fourier_position_embedding_forward.1} parent=35 // pred_check_branch
        %483 = sbr.rel (%p481) target = $region48
      $region47: #{fourier_position_embedding_forward.1} parent=35 // pred_region
        %p484 = scmp.lt.s32.totalorder %s22, 0
        %s485 = scalar_select %p484, %s22, 0
      $region48: #{fourier_position_embedding_forward.1} parent=35 // pred_fallthru
        _
      // Predicated region
      $region49: #{fourier_position_embedding_forward.1} parent=35 // pred_check
        %p486 = pneg %p205
      $region50: #{fourier_position_embedding_forward.1} parent=35 // pred_check_branch
        %488 = sbr.rel (%p486) target = $region52
      $region51: #{fourier_position_embedding_forward.1} parent=35 // pred_region
        %s489 = ssub.s32 %s22, 1
        %p490 = scmp.gt.s32.totalorder %s489, 0
        %s491 = scalar_select %p490, %s489, 0
      $region52: #{fourier_position_embedding_forward.1} parent=35 // pred_fallthru
        _
    $region36: #{fourier_position_embedding_forward.1} parent=5 // pred_fallthru
      _
    %p492 = scmp.le.s32.totalorder 2, %s12
    // Predicated region
    $region53: #{fourier_position_embedding_forward.1} parent=5 // pred_check
      %p493 = pneg %p492
    $region54: #{fourier_position_embedding_forward.1} parent=5 // pred_check_branch
      %495 = sbr.rel (%p493) target = $region56
    $region55: #{fourier_position_embedding_forward.1} parent=5 // pred_region
      %s496 = ssub.s32 %s12, 2
      // Predicated region
      $region57: #{fourier_position_embedding_forward.1} parent=55 // pred_check
        %p497 = pneg %p177
      $region58: #{fourier_position_embedding_forward.1} parent=55 // pred_check_branch
        %499 = sbr.rel (%p497) target = $region60
      $region59: #{fourier_position_embedding_forward.1} parent=55 // pred_region
        %p500 = scmp.lt.s32.totalorder %s24, 0
        %s501 = scalar_select %p500, %s24, 0
        %p502 = scmp.lt.s32.totalorder %s501, 0
        %s503 = scalar_select %p502, %s501, 0
        %p504 = scmp.lt.s32.totalorder %s23, 1
        %s505 = scalar_select %p504, %s23, 1
        %s506 = smul.addr %s503, 2
        %s507 = sadd.s32 %s505, %s506
        %s508 = smul.addr %s507, 8
        %s509 = scalar_lea.vmem %s4, %s508
      $region60: #{fourier_position_embedding_forward.1} parent=55 // pred_fallthru
        _
      // Predicated region
      $region61: #{fourier_position_embedding_forward.1} parent=55 // pred_check
        %p510 = pneg %p211
      $region62: #{fourier_position_embedding_forward.1} parent=55 // pred_check_branch
        %512 = sbr.rel (%p510) target = $region64
      $region63: #{fourier_position_embedding_forward.1} parent=55 // pred_region
        %s513 = ssub.s32 %s24, 1
        %p514 = scmp.gt.s32.totalorder %s513, 0
        %s515 = scalar_select %p514, %s513, 0
        %p516 = scmp.lt.s32.totalorder %s515, 0
        %s517 = scalar_select %p516, %s515, 0
        %p518 = scmp.lt.s32.totalorder %s23, 1
        %s519 = scalar_select %p518, %s23, 1
        %s520 = smul.addr %s517, 2
        %s521 = sadd.s32 %s519, %s520
        %s522 = smul.addr %s521, 4
        %s523 = scalar_lea.vmem %s5, %s522
      $region64: #{fourier_position_embedding_forward.1} parent=55 // pred_fallthru
        _
    $region56: #{fourier_position_embedding_forward.1} parent=5 // pred_fallthru
      _
  $region6: #{fourier_position_embedding_forward.1} parent=0 // loop_footer
    %s16 = sadd.s32 1, %s12
  $region7: #{fourier_position_embedding_forward.1} parent=0 // loop_footer_branch
    %11 = sbr.rel target = $region3
  $region8: #{fourier_position_embedding_forward.1} parent=0 // loop_exit
    _

</llo_original>
